<compile_context>
chip_gen: v5e
topology: v5e:2x2
jax: 0.10.0
libtpu: 0.0.40
codegen_flags: <defaults>
</compile_context>

<pallas_src>
import functools
import math

import jax
import jax.numpy as jnp
from jax.experimental import pallas as pl
from jax.experimental.pallas import tpu as pltpu


# 48 MiB: comfortable on v5e/v6e (128 MiB physical) and leaves headroom on
# v7x (64 MiB per TensorCore) so double-buffering / pipelining is preserved.
_VMEM_LIMIT = 48 * 1024 * 1024


def _round_up(x, m):
    return (x + m - 1) // m * m


def _fit_block(dim, target, align):
    """Largest multiple of `align` that divides `dim` and is <= target.

    Never falls back to the full dim when dim > target (avoids the VMEM /
    vreg-spill cliff flagged in review). Requires dim % align == 0.
    """
    assert dim % align == 0, (dim, align)
    b = min(target, dim)
    b -= b % align
    b = max(b, align)
    while dim % b:
        b -= align
    return b


def _choose_heads_per_block(num_heads, head_dim, embed_dim):
    """Smallest head group whose column width is lane-dense (128-multiple) or
    spans the full embedding dim."""
    for hpb in range(1, num_heads + 1):
        if num_heads % hpb:
            continue
        w = hpb * head_dim
        if w % 128 == 0 or w == embed_dim:
            return hpb
    return num_heads  # hpb == num_heads always gives w == embed_dim


# ---------------------------------------------------------------------------
# Tiled matmul kernels (f32 accumulation on the MXU).
# ---------------------------------------------------------------------------
def _matmul_kernel(x_ref, w_ref, o_ref):
    o_ref[...] = jnp.dot(
        x_ref[...], w_ref[...], preferred_element_type=jnp.float32
    ).astype(o_ref.dtype)


def _matmul(x, w, *, block_m=512, block_n=256):
    """(M, K) @ (K, N) -> (M, N). K untiled (fine for attention-sized E)."""
    M, K = x.shape
    K2, N = w.shape
    assert K == K2
    bm = _fit_block(M, block_m, 8)
    bn = _fit_block(N, block_n, 128) if N % 128 == 0 else N
    grid = (M // bm, N // bn)
    itemsize = jnp.dtype(x.dtype).itemsize
    cost = pl.CostEstimate(
        flops=2 * M * K * N,
        transcendentals=0,
        bytes_accessed=(M * K + K * N * grid[0] + M * N) * itemsize,
    )
    return pl.pallas_call(
        _matmul_kernel,
        out_shape=jax.ShapeDtypeStruct((M, N), x.dtype),
        grid_spec=pltpu.PrefetchScalarGridSpec(
            num_scalar_prefetch=0,
            grid=grid,
            in_specs=[
                pl.BlockSpec((bm, K), lambda i, j: (i, 0)),
                pl.BlockSpec((K, bn), lambda i, j: (0, j)),
            ],
            out_specs=pl.BlockSpec((bm, bn), lambda i, j: (i, j)),
        ),
        compiler_params=pltpu.CompilerParams(
            dimension_semantics=("parallel", "parallel"),
            vmem_limit_bytes=_VMEM_LIMIT,
        ),
        cost_estimate=cost,
    )(x, w)


def _qkv_matmul(x, w3, *, block_m=512, block_n=256):
    """(M, E) @ stacked (3, E, E) weights -> (3, M, E).

    Writes Q/K/V directly in the (3, M, E) layout the flash kernel consumes.
    Grid order (i, p, j): the activation row-block stays resident across the
    whole (p, j) sweep, so activations are read from HBM exactly once.
    """
    M, E = x.shape
    assert w3.shape == (3, E, E)
    bm = _fit_block(M, block_m, 8)
    bn = _fit_block(E, block_n, 128) if E % 128 == 0 else E
    grid = (M // bm, 3, E // bn)
    itemsize = jnp.dtype(x.dtype).itemsize
    cost = pl.CostEstimate(
        flops=2 * 3 * M * E * E,
        transcendentals=0,
        bytes_accessed=(M * E + 3 * E * E * (M // bm) + 3 * M * E) * itemsize,
    )
    return pl.pallas_call(
        _matmul_kernel,
        out_shape=jax.ShapeDtypeStruct((3, M, E), x.dtype),
        grid_spec=pltpu.PrefetchScalarGridSpec(
            num_scalar_prefetch=0,
            grid=grid,
            in_specs=[
                pl.BlockSpec((bm, E), lambda i, p, j: (i, 0)),
                pl.BlockSpec((None, E, bn), lambda i, p, j: (p, 0, j)),
            ],
            out_specs=pl.BlockSpec((None, bm, bn), lambda i, p, j: (p, i, j)),
        ),
        compiler_params=pltpu.CompilerParams(
            dimension_semantics=("parallel", "parallel", "parallel"),
            vmem_limit_bytes=_VMEM_LIMIT,
        ),
        cost_estimate=cost,
    )(x, w3)


# ---------------------------------------------------------------------------
# Flash attention reading head-group column slabs of the (3, B*T, E) QKV array
# and writing merged-heads (B*T, E) output directly (online softmax, f32 acc).
# ---------------------------------------------------------------------------
def _flash_kernel(q_ref, k_ref, v_ref, o_ref, m_ref, l_ref, acc_ref,
                  *, hpb, head_dim, bkv, t_valid, need_mask):
    kv_i = pl.program_id(3)

    @pl.when(kv_i == 0)
    def _():
        m_ref[...] = jnp.full(m_ref.shape, -jnp.inf, jnp.float32)
        l_ref[...] = jnp.zeros(l_ref.shape, jnp.float32)
        acc_ref[...] = jnp.zeros(acc_ref.shape, jnp.float32)

    q = q_ref[...]   # (bq,  hpb*D) in the compute dtype (scale folded into W_q)
    k = k_ref[...]   # (bkv, hpb*D)
    v = v_ref[...]   # (bkv, hpb*D)

    if need_mask:
        kpos = kv_i * bkv + jax.lax.broadcasted_iota(jnp.int32, (1, bkv), 1)
        kmask = kpos < t_valid     # padded key positions get -1e30 scores

    # Static per-head loop over the lane-dense head group (hpb is 1 or 2 for
    # typical D>=64).  KV DMA + output store are shared by the whole group.
    for h in range(hpb):
        sl = slice(h * head_dim, (h + 1) * head_dim)
        qh, kh, vh = q[:, sl], k[:, sl], v[:, sl]
        s = jax.lax.dot_general(
            qh, kh, (((1,), (1,)), ((), ())),
            preferred_element_type=jnp.float32)              # (bq, bkv) f32
        if need_mask:
            s = jnp.where(kmask, s, -1e30)
        m_prev = m_ref[h]                                     # (bq, 1)
        m_new = jnp.maximum(m_prev, jnp.max(s, axis=-1, keepdims=True))
        alpha = jnp.exp(m_prev - m_new)
        p = jnp.exp(s - m_new)
        l_ref[h] = alpha * l_ref[h] + jnp.sum(p, axis=-1, keepdims=True)
        acc_ref[h] = alpha * acc_ref[h] + jnp.dot(
            p.astype(vh.dtype), vh, preferred_element_type=jnp.float32)
        m_ref[h] = m_new

    @pl.when(kv_i == pl.num_programs(3) - 1)
    def _():
        # Exact reciprocal (epilogue-only; keeps tight f32 tolerances).
        parts = [acc_ref[h] * pl.reciprocal(l_ref[h], approx=False)
                 for h in range(hpb)]
        out = parts[0] if hpb == 1 else jnp.concatenate(parts, axis=-1)
        o_ref[...] = out.astype(o_ref.dtype)


def _flash_attention(qkv3, *, batch, t_pad, t_valid, num_heads, head_dim,
                     bq, bkv):
    three, M, E = qkv3.shape
    assert three == 3 and M == batch * t_pad and E == num_heads * head_dim
    assert t_pad % bq == 0 and t_pad % bkv == 0

    hpb = _choose_heads_per_block(num_heads, head_dim, E)
    w = hpb * head_dim
    n_hg = num_heads // hpb
    n_q = t_pad // bq
    n_kv = t_pad // bkv
    need_mask = (t_pad != t_valid)

    grid = (batch, n_hg, n_q, n_kv)

    def q_map(b, hg, qi, ki):
        return (0, b * n_q + qi, hg)

    def k_map(b, hg, qi, ki):
        return (1, b * n_kv + ki, hg)

    def v_map(b, hg, qi, ki):
        return (2, b * n_kv + ki, hg)

    def o_map(b, hg, qi, ki):
        return (b * n_q + qi, hg)

    kernel = functools.partial(
        _flash_kernel, hpb=hpb, head_dim=head_dim, bkv=bkv,
        t_valid=t_valid, need_mask=need_mask)

    itemsize = jnp.dtype(qkv3.dtype).itemsize
    cost = pl.CostEstimate(
        flops=4 * batch * num_heads * t_pad * t_pad * head_dim,
        transcendentals=batch * num_heads * t_pad * t_pad,
        bytes_accessed=(batch * t_pad * E                 # Q read once
                        + 2 * batch * t_pad * E * n_q     # K, V per q tile
                        + batch * t_pad * E) * itemsize,  # output
    )

    return pl.pallas_call(
        kernel,
        out_shape=jax.ShapeDtypeStruct((M, E), qkv3.dtype),
        grid_spec=pltpu.PrefetchScalarGridSpec(
            num_scalar_prefetch=0,
            grid=grid,
            in_specs=[
                pl.BlockSpec((None, bq, w), q_map),
                pl.BlockSpec((None, bkv, w), k_map),
                pl.BlockSpec((None, bkv, w), v_map),
            ],
            out_specs=pl.BlockSpec((bq, w), o_map),
            scratch_shapes=[
                pltpu.VMEM((hpb, bq, 1), jnp.float32),         # running max
                pltpu.VMEM((hpb, bq, 1), jnp.float32),         # running denom
                pltpu.VMEM((hpb, bq, head_dim), jnp.float32),  # output acc
            ],
        ),
        compiler_params=pltpu.CompilerParams(
            dimension_semantics=("parallel", "parallel", "parallel",
                                 "arbitrary"),
            vmem_limit_bytes=_VMEM_LIMIT,
        ),
        cost_estimate=cost,
    )(qkv3, qkv3, qkv3)


# ---------------------------------------------------------------------------
# Full STLAttention forward (self-attention, no mask, eval mode).
# ---------------------------------------------------------------------------
def stl_attention(hidden_states, wq, wk, wv, wo, *, num_heads,
                  block_q=256, block_kv=256, block_m=512, block_n=256,
                  compute_dtype=None):
    """hidden_states: (B, T, E); w* are torch-style (out, in) Linear weights.

    compute_dtype=jnp.bfloat16 runs all matmuls with bf16 operands (f32
    accumulation, f32 softmax) for ~4x MXU rate and half the HBM traffic.
    """
    B, T, E = hidden_states.shape
    D = E // num_heads
    assert D * num_heads == E
    scaling = D ** (-0.5)

    orig_dtype = hidden_states.dtype
    cdt = jnp.dtype(compute_dtype) if compute_dtype is not None else orig_dtype

    # nn.Linear(x) == x @ W.T (bias=False). Fold softmax scale into W_q in
    # f32 *before* the compute-dtype cast; stack the three projections into
    # one (3, E, E) operand so QKV is a single fused kernel.
    # TODO(synk): for inference, hoist this weight prep to a one-time step.
    w3 = jnp.stack([wq.astype(jnp.float32).T * scaling,
                    wk.astype(jnp.float32).T,
                    wv.astype(jnp.float32).T], axis=0).astype(cdt)
    wo_t = wo.T.astype(cdt)

    # Attention tiling. Blocks never exceed the requested targets; instead,
    # T is padded up to the tile and padded keys are masked in-kernel.
    block_q = max(8, block_q - block_q % 8)
    block_kv = max(8, block_kv - block_kv % 8)
    bq = max(8, min(block_q, _round_up(T, 8)))
    bkv = max(8, min(block_kv, _round_up(T, 8)))
    t_pad = _round_up(T, math.lcm(bq, bkv))

    x = hidden_states.astype(cdt)
    if t_pad != T:
        x = jnp.pad(x, ((0, 0), (0, t_pad - T), (0, 0)))
    x2d = x.reshape(B * t_pad, E)

    # 1) Fused QKV projection -> (3, B*t_pad, E); no later transposes needed.
    qkv3 = _qkv_matmul(x2d, w3, block_m=block_m, block_n=block_n)

    # 2) Flash attention: reads per-head-group column slabs of qkv3, writes
    #    the merged-heads (B*t_pad, E) layout directly.
    attn = _flash_attention(qkv3, batch=B, t_pad=t_pad, t_valid=T,
                            num_heads=num_heads, head_dim=D, bq=bq, bkv=bkv)

    # 3) Output projection on the already-flat activations.
    out = _matmul(attn, wo_t, block_m=block_m, block_n=block_n)

    out = out.reshape(B, t_pad, E)
    if t_pad != T:
        out = out[:, :T, :]
    return out.astype(orig_dtype)


# ---------------------------------------------------------------------------
# Pure-JAX reference mirroring the PyTorch forward (self-attn path).
# ---------------------------------------------------------------------------
def stl_attention_ref(hidden_states, wq, wk, wv, wo, *, num_heads):
    B, T, E = hidden_states.shape
    D = E // num_heads
    scaling = D ** (-0.5)
    q = (hidden_states @ wq.T) * scaling
    k = hidden_states @ wk.T
    v = hidden_states @ wv.T

    def shape(t):
        return t.reshape(B, T, num_heads, D).transpose(0, 2, 1, 3)

    q, k, v = shape(q), shape(k), shape(v)
    s = jnp.einsum('bhtd,bhsd->bhts', q, k)
    p = jax.nn.softmax(s, axis=-1)
    o = jnp.einsum('bhts,bhsd->bhtd', p, v)
    o = o.transpose(0, 2, 1, 3).reshape(B, T, E)
    return o @ wo.T


if __name__ == "__main__":
    def _run_case(B, T, E, H, seed, compute_dtype=None, atol=2e-3, rtol=2e-3):
        key = jax.random.PRNGKey(seed)
        kx, kq, kk, kv, ko = jax.random.split(key, 5)
        x = jax.random.normal(kx, (B, T, E), dtype=jnp.float32)
        bound = 1.0 / math.sqrt(E)
        wq = jax.random.uniform(kq, (E, E), jnp.float32, -bound, bound)
        wk = jax.random.uniform(kk, (E, E), jnp.float32, -bound, bound)
        wv = jax.random.uniform(kv, (E, E), jnp.float32, -bound, bound)
        wo = jax.random.uniform(ko, (E, E), jnp.float32, -bound, bound)

        out = stl_attention(x, wq, wk, wv, wo, num_heads=H,
                            compute_dtype=compute_dtype)
        out = jax.block_until_ready(out)
        ref = stl_attention_ref(x, wq, wk, wv, wo, num_heads=H)
        assert out.shape == (B, T, E)
        assert jnp.allclose(out, ref, atol=atol, rtol=rtol), (
            f"mismatch vs reference at B={B} T={T} E={E} H={H} "
            f"dtype={compute_dtype}")

    # Small shape (module's minimal config): full-E head group, tiny tiles.
    _run_case(B=2, T=8, E=32, H=4, seed=0)
    # Larger shape: D=64 -> 2 heads per grid step, 128-lane blocks, 256 tiles.
    _run_case(B=2, T=256, E=256, H=4, seed=0)
    # Non-multiple sequence length: exercises T-padding + in-kernel key mask.
    _run_case(B=2, T=100, E=128, H=2, seed=1)
    # bf16 compute path (f32 accumulation / f32 softmax): loose smoke check.
    _run_case(B=2, T=256, E=256, H=4, seed=0,
              compute_dtype=jnp.bfloat16, atol=1e-1, rtol=1e-1)

    print("KERNEL_OK")
</pallas_src>

<mosaic_0001>
module attributes {stable_mosaic.version = 11 : i64} {
  func.func @_matmul_kernel(%arg0: i32, %arg1: i32, %arg2: i32, %arg3: memref<16x32xf32, #tpu.memory_space<vmem>>, %arg4: memref<1x32x32xf32, #tpu.memory_space<vmem>>, %arg5: memref<1x16x32xf32, #tpu.memory_space<vmem>>) attributes {dimension_semantics = [#tpu.dimension_semantics<parallel>, #tpu.dimension_semantics<parallel>, #tpu.dimension_semantics<parallel>], iteration_bounds = array<i64: 1, 3, 1>, scalar_prefetch = 0 : i64, scratch_operands = 0 : i64, tpu.core_type = #tpu.core_type<tc>, window_params = [{transform_indices = @transform_0, window_bounds = array<i64: 16, 32>}, {transform_indices = @transform_1, window_bounds = array<i64: 1, 32, 32>}, {transform_indices = @transform_2, window_bounds = array<i64: 1, 16, 32>}]} {
    %c0 = arith.constant 0 : index
    %c0_0 = arith.constant 0 : index
    %0 = vector.load %arg3[%c0, %c0_0] : memref<16x32xf32, #tpu.memory_space<vmem>>, vector<16x32xf32>
    %c0_1 = arith.constant 0 : index
    %c0_2 = arith.constant 0 : index
    %c0_3 = arith.constant 0 : index
    %1 = vector.load %arg4[%c0_1, %c0_2, %c0_3] : memref<1x32x32xf32, #tpu.memory_space<vmem>>, vector<1x32x32xf32>
    %2 = vector.shape_cast %1 : vector<1x32x32xf32> to vector<32x32xf32>
    %cst = arith.constant dense<0.000000e+00> : vector<16x32xf32>
    %3 = tpu.matmul %0, %2, %cst {dimension_numbers = #tpu.dot_dimension_numbers<[1], [0], [0], [1], [0, 0, 1, 1], [], []>} : vector<16x32xf32>, vector<32x32xf32>, vector<16x32xf32> -> vector<16x32xf32>
    %c0_4 = arith.constant 0 : index
    %c0_5 = arith.constant 0 : index
    %c0_6 = arith.constant 0 : index
    %4 = vector.load %arg5[%c0_4, %c0_5, %c0_6] : memref<1x16x32xf32, #tpu.memory_space<vmem>>, vector<1x16x32xf32>
    %5 = vector.shape_cast %4 : vector<1x16x32xf32> to vector<16x32xf32>
    %6 = vector.shape_cast %3 : vector<16x32xf32> to vector<1x16x32xf32>
    tpu.vector_store %arg5[%c0_4, %c0_5, %c0_6], %6 {strides = array<i32>} : memref<1x16x32xf32, #tpu.memory_space<vmem>>, vector<1x16x32xf32>,
    return
  }
  func.func @transform_0(%arg0: i32, %arg1: i32, %arg2: i32) -> (i32, i32) {
    %c0_i32 = arith.constant 0 : i32
    %c0_i32_0 = arith.constant 0 : i32
    return %arg0, %c0_i32 : i32, i32
  }
  func.func @transform_1(%arg0: i32, %arg1: i32, %arg2: i32) -> (i32, i32, i32) {
    %c0_i32 = arith.constant 0 : i32
    %c0_i32_0 = arith.constant 0 : i32
    return %arg1, %c0_i32, %arg2 : i32, i32, i32
  }
  func.func @transform_2(%arg0: i32, %arg1: i32, %arg2: i32) -> (i32, i32, i32) {
    %c0_i32 = arith.constant 0 : i32
    return %arg1, %arg0, %arg2 : i32, i32, i32
  }
}

</mosaic_0001>

<llo_original>
// kernel: tpu_custom_call.1
$region0: #{tpu_custom_call.1}
  #allocation0 [shape = 'u32[]', space=smem, size = 0x4, offset = 0x4, fixed_abs, tag = 'smem constant byte address 0x4 - core index']
  #allocation1 [shape = 'u32[72,128]{1,0:T(1,128)}', space=vmem, size = 0x9000, scoped, tag = 'internal scratch']
  %s0 = inlined_call_operand.hbm [shape: f32[16,32], index: 0, kind: input, shape index: {}]
  %s1 = inlined_call_operand.hbm [shape: f32[3,32,32], index: 1, kind: input, shape index: {}]
  %s2 = inlined_call_operand.hbm [shape: f32[3,16,32], index: 2, kind: output, shape index: {}]
  %s3 = sld [smem:[#allocation0]]
  $region49: #{tpu_custom_call.1} parent=0
    _
  %s5 = ssub.s32 1, %s3
  %s6 = scalar_select 0, %s5, %s3
  $region1: #{tpu_custom_call.1} parent=0
    #allocation2 [shape = 'u8[8192]{0}', space=vmem, size = 0x2000, scoped, tag = 'input window, operand 0, single buffered']
    #allocation3 [shape = 's32[2]{0}', space=sflag, size = 0x8, scoped, tag = 'scoped memory for tpu_custom_call.1']
    #allocation4 [shape = 's32[2]{0}', space=sflag, size = 0x8, scoped, tag = 'scoped memory for tpu_custom_call.1']
    #allocation5 [shape = 'u8[32768]{0}', space=vmem, size = 0x8000, scoped, tag = 'input window, operand 1']
    #allocation6 [shape = 's32[2]{0}', space=sflag, size = 0x8, scoped, tag = 'scoped memory for tpu_custom_call.1']
    #allocation7 [shape = 'u8[16384]{0}', space=vmem, size = 0x4000, scoped, tag = 'output window, operand 0']
    %7 = vsyncpa [#allocation3], 0
    %8 = vsyncpa [#allocation6], 0
    %s9 = scalar_lea.sflag [#allocation6], 1
    %10 = vsyncpa %s9, 0
    %11 = vsyncpa [#allocation4], 0
    %s12 = scalar_lea.sflag [#allocation4], 1
    %13 = vsyncpa %s12, 0
    loop: start=0, step=1, limit=5
    $region2: #{tpu_custom_call.1} parent=1 // loop_pre_header
      _
    $region3: #{tpu_custom_call.1} parent=1 // loop_header
      %s15 = sphi 0, %s19
      %p16 = scmp.ge.s32.totalorder %s15, 5
      %s22 = sphi 0, %s41
      %s23 = sphi 0, %s37
      %s24 = sphi 0, %s33
      %s25 = sphi 0, %s22
      %s26 = sphi 0, %s23
      %s27 = sphi 0, %s24
      %s28 = sphi 0, %s25
      %s29 = sphi 0, %s26
      %s30 = sphi 0, %s27
      %s44 = sphi 0, %s46
      %s47 = sphi 0, %s44
      %s48 = sphi 0, %s47
      %s64 = sphi 0, %s48
      %s72 = sphi 0, %s74
      %s75 = sphi 0, %s72
      %s76 = sphi 0, %s75
      %s92 = sphi 0, %s76
      %s102 = sphi 0, %s104
      %s105 = sphi 0, %s102
      %s106 = sphi 0, %s105
      %s122 = sphi 0, %s106
    $region4: #{tpu_custom_call.1} parent=1 // loop_header_branch
      %18 = sbr.rel (%p16) target = $region8
    $region5: #{tpu_custom_call.1} parent=1 // loop_body
      %s20 = ssub.s32 %s15, 1
      %s21 = ssub.s32 %s15, 2
      %s31 = sadd.s32 1, %s24
      %p32 = scmp.ge.s32.totalorder %s31, 1
      %s33 = scalar_select %p32, 0, %s31
      %s34 = sadd.s32 1, %s23
      %s35 = scalar_select %p32, %s34, %s23
      %p36 = scmp.ge.s32.totalorder %s35, 3
      %s37 = scalar_select %p36, 0, %s35
      %s38 = sadd.s32 1, %s22
      %s39 = scalar_select %p36, %s38, %s22
      %p40 = scmp.ge.s32.totalorder %s39, 1
      %s41 = scalar_select %p40, 0, %s39
      %s42 = ssub.s32 %s22, %s41
      %p43 = scmp.eq.s32.totalorder %s42, 0
      %s45 = sadd.s32 %s44, 1
      %s46 = scalar_select %p43, %s44, %s45
      %p49 = pneg %p43
      %p50 = scmp.eq.s32.totalorder %s15, 2
      %p51 = por %p49, %p50
      %p52 = scmp.ne.s32.totalorder %s44, %s47
      %p53 = scmp.eq.s32.totalorder %s15, 0
      %p54 = por %p52, %p53
      %p55 = scmp.ne.s32.totalorder %s44, %s47
      %p56 = scmp.eq.s32.totalorder %s20, 2
      %p57 = por %p55, %p56
      %p58 = scmp.ne.s32.totalorder %s47, %s48
      %p59 = scmp.eq.s32.totalorder %s20, 0
      %p60 = por %p58, %p59
      %p61 = scmp.ne.s32.totalorder %s47, %s48
      %p62 = scmp.eq.s32.totalorder %s21, 2
      %p63 = por %p61, %p62
      %p65 = scmp.ne.s32.totalorder %s48, %s64
      %p66 = scmp.eq.s32.totalorder %s21, 0
      %p67 = por %p65, %p66
      %s68 = ssub.s32 %s23, %s37
      %s69 = ssub.s32 %s24, %s33
      %s70 = sor.u32 %s68, %s69
      %p71 = scmp.eq.s32.totalorder %s70, 0
      %s73 = sadd.s32 %s72, 1
      %s74 = scalar_select %p71, %s72, %s73
      %p77 = pneg %p71
      %p78 = scmp.eq.s32.totalorder %s15, 2
      %p79 = por %p77, %p78
      %p80 = scmp.ne.s32.totalorder %s72, %s75
      %p81 = scmp.eq.s32.totalorder %s15, 0
      %p82 = por %p80, %p81
      %p83 = scmp.ne.s32.totalorder %s72, %s75
      %p84 = scmp.eq.s32.totalorder %s20, 2
      %p85 = por %p83, %p84
      %p86 = scmp.ne.s32.totalorder %s75, %s76
      %p87 = scmp.eq.s32.totalorder %s20, 0
      %p88 = por %p86, %p87
      %p89 = scmp.ne.s32.totalorder %s75, %s76
      %p90 = scmp.eq.s32.totalorder %s21, 2
      %p91 = por %p89, %p90
      %p93 = scmp.ne.s32.totalorder %s76, %s92
      %p94 = scmp.eq.s32.totalorder %s21, 0
      %p95 = por %p93, %p94
      %s96 = ssub.s32 %s23, %s37
      %s97 = ssub.s32 %s22, %s41
      %s98 = sor.u32 %s96, %s97
      %s99 = ssub.s32 %s24, %s33
      %s100 = sor.u32 %s98, %s99
      %p101 = scmp.eq.s32.totalorder %s100, 0
      %s103 = sadd.s32 %s102, 1
      %s104 = scalar_select %p101, %s102, %s103
      %p107 = pneg %p101
      %p108 = scmp.eq.s32.totalorder %s15, 2
      %p109 = por %p107, %p108
      %p110 = scmp.ne.s32.totalorder %s102, %s105
      %p111 = scmp.eq.s32.totalorder %s15, 0
      %p112 = por %p110, %p111
      %p113 = scmp.ne.s32.totalorder %s102, %s105
      %p114 = scmp.eq.s32.totalorder %s20, 2
      %p115 = por %p113, %p114
      %p116 = scmp.ne.s32.totalorder %s105, %s106
      %p117 = scmp.eq.s32.totalorder %s20, 0
      %p118 = por %p116, %p117
      %p119 = scmp.ne.s32.totalorder %s105, %s106
      %p120 = scmp.eq.s32.totalorder %s21, 2
      %p121 = por %p119, %p120
      %p123 = scmp.ne.s32.totalorder %s106, %s122
      %p124 = scmp.eq.s32.totalorder %s21, 0
      %p125 = por %p123, %p124
      %p126 = scmp.le.s32.totalorder 1, %s15
      %p127 = scmp.lt.s32.totalorder %s15, 4
      %p128 = pnand %p126, %p127
      %p129 = pneg %p128
      // Predicated region
      $region9: #{tpu_custom_call.1} parent=5 // pred_check
        _
      $region10: #{tpu_custom_call.1} parent=5 // pred_check_branch
        %131 = sbr.rel (%p128) target = $region12
      $region11: #{tpu_custom_call.1} parent=5 // pred_region
        %s132 = ssub.s32 %s15, 1
        // Predicated region
        $region13: #{tpu_custom_call.1} parent=11 // pred_check
          %p133 = pneg %p60
        $region14: #{tpu_custom_call.1} parent=11 // pred_check_branch
          %135 = sbr.rel (%p133) target = $region16
        $region15: #{tpu_custom_call.1} parent=11 // pred_region
          %s136 = smul.u32 2, %s25
          %138 = vsyncadd [#allocation3], 0
          %s139 = smul.addr %s136, 8
          %s140 = scalar_lea.hbm %s0, %s139
          %s141 = sshll.u32 %s140, 4
          %s142 = int_to_ptr.hbm [resolvable:$true] %s141
          %s143 = sshll.u32 [#allocation2], 4
          %s144 = int_to_ptr.vmem [resolvable:$true] %s143
          %149 = dma.hbm_to_vmem [thread:$0]  %s142, 256, %s144, [#allocation3], 128, 128, 8
        $region16: #{tpu_custom_call.1} parent=11 // pred_fallthru
          _
      $region12: #{tpu_custom_call.1} parent=5 // pred_fallthru
        _
      %p150 = scmp.lt.s32.totalorder %s15, 3
      // Predicated region
      $region17: #{tpu_custom_call.1} parent=5 // pred_check
        %p151 = pneg %p150
      $region18: #{tpu_custom_call.1} parent=5 // pred_check_branch
        %153 = sbr.rel (%p151) target = $region20
      $region19: #{tpu_custom_call.1} parent=5 // pred_region
        // Predicated region
        $region21: #{tpu_custom_call.1} parent=19 // pred_check
          %p154 = pneg %p82
        $region22: #{tpu_custom_call.1} parent=19 // pred_check_branch
          %156 = sbr.rel (%p154) target = $region24
        $region23: #{tpu_custom_call.1} parent=19 // pred_region
          %s157 = sand.u32 %s72, 1
          %s158 = scalar_lea.sflag [#allocation6], %s157
          %s159 = sand.u32 %s72, 1
          %s160 = smul.addr %s159, 32
          %s161 = scalar_lea.vmem [#allocation5], %s160
          %163 = vsyncadd %s158, 0
          %s164 = smul.addr %s23, 4
          %s165 = sadd.s32 %s24, %s164
          %s166 = smul.addr %s165, 8
          %s167 = scalar_lea.hbm %s1, %s166
          %s168 = sshll.u32 %s167, 4
          %s169 = int_to_ptr.hbm [resolvable:$true] %s168
          %s170 = sshll.u32 %s161, 4
          %s171 = int_to_ptr.vmem [resolvable:$true] %s170
          %176 = dma.hbm_to_vmem [thread:$0]  %s169, 512, %s171, %s158, 128, 128, 8
        $region24: #{tpu_custom_call.1} parent=19 // pred_fallthru
          _
      $region20: #{tpu_custom_call.1} parent=5 // pred_fallthru
        _
      %p177 = scmp.le.s32.totalorder 1, %s15
      %p178 = scmp.lt.s32.totalorder %s15, 4
      %p179 = pnand %p177, %p178
      %p180 = pneg %p179
      // Predicated region
      $region25: #{tpu_custom_call.1} parent=5 // pred_check
        _
      $region26: #{tpu_custom_call.1} parent=5 // pred_check_branch
        %182 = sbr.rel (%p179) target = $region28
      $region27: #{tpu_custom_call.1} parent=5 // pred_region
        %s183 = ssub.s32 %s15, 1
        // Predicated region
        $region29: #{tpu_custom_call.1} parent=27 // pred_check
          %p184 = pneg %p60
        $region30: #{tpu_custom_call.1} parent=27 // pred_check_branch
          %186 = sbr.rel (%p184) target = $region32
        $region31: #{tpu_custom_call.1} parent=27 // pred_region
          %188 = dma.done [#allocation3], 256
        $region32: #{tpu_custom_call.1} parent=27 // pred_fallthru
          _
        %s189 = sand.u32 %s75, 1
        %s190 = scalar_lea.sflag [#allocation6], %s189
        %s191 = sand.u32 %s75, 1
        %s192 = smul.addr %s191, 32
        %s193 = scalar_lea.vmem [#allocation5], %s192
        // Predicated region
        $region33: #{tpu_custom_call.1} parent=27 // pred_check
          %p194 = pneg %p88
        $region34: #{tpu_custom_call.1} parent=27 // pred_check_branch
          %196 = sbr.rel (%p194) target = $region36
        $region35: #{tpu_custom_call.1} parent=27 // pred_region
          %198 = dma.done %s190, 512
        $region36: #{tpu_custom_call.1} parent=27 // pred_fallthru
          _
        %p199 = pneg %p60
        %p200 = pneg %p57
        %s201 = sand.u32 %s75, 1
        %s202 = scalar_lea.sflag [#allocation6], %s201
        %s203 = sand.u32 %s75, 1
        %s204 = smul.addr %s203, 32
        %s205 = scalar_lea.vmem [#allocation5], %s204
        %p206 = pneg %p88
        %p207 = pneg %p85
        %p208 = pneg %p118
        %p209 = pneg %p115
        %s210 = sand.u32 %s105, 1
        %s211 = scalar_lea.sflag [#allocation4], %s210
        %s212 = sand.u32 %s105, 1
        %s213 = smul.addr %s212, 16
        %s214 = scalar_lea.vmem [#allocation7], %s213
        %s215 = smul.u32 2, %s25
        %s216 = smul.u32 2, %s25
        %v217 = vld [vmem:[#allocation2] sm:$0xff]
        %v218 = vld [vmem:[#allocation2 + $0x8] sm:$0xff]
        %v219 = vld [vmem:[%s193] sm:$0xff]
        %v220 = vld [vmem:[%s193 + $0x8] sm:$0xff]
        %v221 = vld [vmem:[%s193 + $0x10] sm:$0xff]
        %v222 = vld [vmem:[%s193 + $0x18] sm:$0xff]
        %vm223 = vcmask 261120
        %v225 = vsel %vm223, %v217, 0
        %v228 = vsel %vm223, %v218, 0
        %230 = vmatpush.msra.mxu0 0.0
        %231 = vmatpush.msra.mxu0 0.0
        %232 = vmatpush.msra.mxu0 0.0
        %233 = vmatpush.msra.mxu0 0.0
        %234 = vmatpush.msra.mxu0 0.0
        %235 = vmatpush.msra.mxu0 0.0
        %236 = vmatpush.msra.mxu0 0.0
        %237 = vmatpush.msra.mxu0 0.0
        %238 = vmatpush.msra.mxu0 0.0
        %239 = vmatpush.msra.mxu0 0.0
        %240 = vmatpush.msra.mxu0 0.0
        %241 = vmatpush.msra.mxu0 0.0
        %242 = vmatpush.msra.mxu0 %v222
        %243 = vmatpush.msra.mxu0 %v221
        %244 = vmatpush.msra.mxu0 %v220
        %245 = vmatpush.msra.mxu0 %v219
        %246 = vmatmul.f32.gmra.mxu0 %v225
        %v247 = vpop.f32.mrf.mxu0
        %v248 = vadd.f32 0.0, %v247
        %249 = vmatmul.f32.gmra.mxu0 %v228
        %v250 = vpop.f32.mrf.mxu0
        %v251 = vadd.f32 0.0, %v250
        %252 = vdwg.mxu0
        %253 = vst.msk [vmem:[%s214] sm:$0xff] %vm223, %v248
        %254 = vst.msk [vmem:[%s214 + $0x8] sm:$0xff] %vm223, %v251
        %s255 = sand.u32 %s105, 1
        %s256 = scalar_lea.sflag [#allocation4], %s255
        %s257 = sand.u32 %s105, 1
        %s258 = smul.addr %s257, 16
        %s259 = scalar_lea.vmem [#allocation7], %s258
        // Predicated region
        $region37: #{tpu_custom_call.1} parent=27 // pred_check
          %p260 = pneg %p115
        $region38: #{tpu_custom_call.1} parent=27 // pred_check_branch
          %262 = sbr.rel (%p260) target = $region40
        $region39: #{tpu_custom_call.1} parent=27 // pred_region
          %s263 = smul.u32 2, %s25
          %265 = vsyncadd %s256, 0
          %s266 = sadd.s32 %s27, %s263
          %s267 = smul.addr %s26, 2
          %s268 = sadd.s32 %s266, %s267
          %s269 = smul.addr %s268, 8
          %s270 = scalar_lea.hbm %s2, %s269
          %s271 = sshll.u32 %s259, 4
          %s272 = int_to_ptr.vmem [resolvable:$true] %s271
          %s273 = sshll.u32 %s270, 4
          %s274 = int_to_ptr.hbm [resolvable:$true] %s273
          %279 = dma.vmem_to_hbm [thread:$0]  %s272, 256, %s274, %s256, 128, 128, 8
        $region40: #{tpu_custom_call.1} parent=27 // pred_fallthru
          _
      $region28: #{tpu_custom_call.1} parent=5 // pred_fallthru
        _
      %p280 = scmp.le.s32.totalorder 2, %s15
      // Predicated region
      $region41: #{tpu_custom_call.1} parent=5 // pred_check
        %p281 = pneg %p280
      $region42: #{tpu_custom_call.1} parent=5 // pred_check_branch
        %283 = sbr.rel (%p281) target = $region44
      $region43: #{tpu_custom_call.1} parent=5 // pred_region
        %s284 = ssub.s32 %s15, 2
        // Predicated region
        $region45: #{tpu_custom_call.1} parent=43 // pred_check
          %p285 = pneg %p121
        $region46: #{tpu_custom_call.1} parent=43 // pred_check_branch
          %287 = sbr.rel (%p285) target = $region48
        $region47: #{tpu_custom_call.1} parent=43 // pred_region
          %s288 = sand.u32 %s106, 1
          %s289 = scalar_lea.sflag [#allocation4], %s288
          %s290 = sand.u32 %s106, 1
          %s291 = smul.addr %s290, 16
          %s292 = scalar_lea.vmem [#allocation7], %s291
          %294 = dma.done %s289, 256
        $region48: #{tpu_custom_call.1} parent=43 // pred_fallthru
          _
      $region44: #{tpu_custom_call.1} parent=5 // pred_fallthru
        _
    $region6: #{tpu_custom_call.1} parent=1 // loop_footer
      %s19 = sadd.s32 1, %s15
    $region7: #{tpu_custom_call.1} parent=1 // loop_footer_branch
      %14 = sbr.rel target = $region3
    $region8: #{tpu_custom_call.1} parent=1 // loop_exit
      _
    %295 = vsyncpa [#allocation3], 1
    %s296 = scalar_lea.sflag [#allocation3], 1
    %297 = vsyncpa %s296, 1
    %298 = vsyncpa [#allocation6], 1
    %s299 = scalar_lea.sflag [#allocation6], 1
    %300 = vsyncpa %s299, 1
    %301 = vsyncpa [#allocation4], 1
    %s302 = scalar_lea.sflag [#allocation4], 1
    %303 = vsyncpa %s302, 1

</llo_original>
